<compile_context>
chip_gen: v5e
topology: v5e:2x2
jax: 0.10.0
libtpu: 0.0.40
codegen_flags: <defaults>
</compile_context>

<pallas_src>
from functools import partial

import jax
import jax.numpy as jnp
from jax.experimental import pallas as pl
from jax.experimental.pallas import tpu as pltpu


def _enhancer_kernel(proto_ref, qf_ref, wq_ref, bq_ref, wkv_ref, bkv_ref,
                     wo_ref, post_ref, h_ref, ht_ref, out_ref, *, eps):
    tb, N, D = qf_ref.shape
    E = wq_ref.shape[1]
    num_heads = h_ref.shape[1]

    qf = qf_ref[...].astype(jnp.float32)                 # (tb, N, D) f32 (residual/LN)
    qf_bf = qf.astype(jnp.bfloat16)
    proto_bf = proto_ref[...].reshape(tb, -1).astype(jnp.bfloat16)   # (tb, P)

    # ---- projections (MXU, explicit bf16 operands, f32 accumulation) ---------
    # Q: ONE row per batch (the prototype query is broadcast over N positions);
    # the 1/sqrt(head_dim) scale is folded into wq/bq at setup time.
    q = jnp.dot(proto_bf, wq_ref[...],
                preferred_element_type=jnp.float32) + bq_ref[...]          # (tb, E)

    # K and V from a single fused matmul over the flattened rows of this tile.
    kv = jnp.dot(qf_bf.reshape(tb * N, D), wkv_ref[...],
                 preferred_element_type=jnp.float32) + bkv_ref[...]        # (tb*N, 2E)
    k = kv[:, :E].reshape(tb, N, E)
    v = kv[:, E:].reshape(tb, N, E)

    # ---- attention with a single query row per batch --------------------------
    # s[b, n, h] = sum_{e in head h} q[b, e] * k[b, n, e]   (H is 0/1, exact in bf16)
    qk = (q[:, None, :] * k).astype(jnp.bfloat16)                          # (tb, N, E)
    s = jnp.dot(qk.reshape(tb * N, E), h_ref[...],
                preferred_element_type=jnp.float32).reshape(tb, N, num_heads)

    # Softmax over the N key positions with DEFERRED normalization: keep
    # exp(s - max), expand per-head values to the E lanes via HT, accumulate
    # numerator and denominator, and divide once with an EUP approx reciprocal.
    s = s - jnp.max(s, axis=1, keepdims=True)
    p = jnp.exp(s).astype(jnp.bfloat16)                                    # (tb, N, heads)
    p_exp = jnp.dot(p.reshape(tb * N, num_heads), ht_ref[...],
                    preferred_element_type=jnp.float32).reshape(tb, N, E)  # (tb, N, E)
    o_num = jnp.sum(p_exp * v, axis=1)                                     # (tb, E)
    denom = jnp.sum(p_exp, axis=1)                                         # (tb, E)  (>= 1)
    o = o_num * pl.reciprocal(denom, approx=True)                          # (tb, E)

    # ---- output projection (tb rows only) + residual + LayerNorm --------------
    post = post_ref[...]                       # (3, D): out-proj bias, gamma, beta
    o = jnp.dot(o.astype(jnp.bfloat16), wo_ref[...],
                preferred_element_type=jnp.float32) + post[0:1, :]         # (tb, D)

    y = qf + o[:, None, :]                     # broadcast attention row over N
    # Single-pass moments: two independent lane reductions, var = E[y^2] - mean^2.
    mean = jnp.mean(y, axis=-1, keepdims=True)
    mean_sq = jnp.mean(y * y, axis=-1, keepdims=True)
    var = mean_sq - mean * mean
    y = (y - mean) * jax.lax.rsqrt(var + eps)
    y = y * post[1:2, :] + post[2:3, :]
    out_ref[...] = y.astype(out_ref.dtype)


def _pick_batch_tile(B, N, D):
    """Batch rows per grid step.

    Prefer >= 2 grid steps when possible (one per v7x TensorCore) while keeping
    the double-buffered streamed tile (query_feat + output) small enough to sit
    comfortably inside v7x's 32 MiB scoped VMEM alongside the resident weights.
    """
    if B <= 1:
        return 1
    row_bytes = N * D * 4
    max_rows = max(1, (4 * 1024 * 1024) // row_bytes)     # ~4 MiB per qf tile
    tb = 1
    for cand in range(1, B // 2 + 1):                      # <= B//2  ->  >= 2 steps
        if B % cand == 0 and cand <= max_rows:
            tb = cand
    return tb


def cross_attention_enhancer(prototype_feat, query_feat, params, *, num_heads,
                             eps=1e-5, batch_tile=None):
    B, P = prototype_feat.shape
    _, N, D = query_feat.shape
    E = params["wq"].shape[1]
    head_dim = E // num_heads
    assert head_dim * num_heads == E

    tb = batch_tile if batch_tile is not None else _pick_batch_tile(B, N, D)
    assert B % tb == 0, "batch tile must divide B"
    grid = (B // tb,)

    # Setup-time parameter packing (done once at model-load time in practice):
    #  * fold the 1/sqrt(head_dim) attention scale into the Q projection,
    #  * fuse K/V weights into one (D, 2E) matrix,
    #  * cast MXU weight operands to bf16 (halves weight DMA traffic),
    #  * pack the three (1, D) epilogue vectors into one (3, D) array,
    #  * precompute the 0/1 head-membership matrices H / HT (exact in bf16).
    scale = 1.0 / (head_dim ** 0.5)
    wq = (params["wq"] * scale).astype(jnp.bfloat16)
    bq = (params["bq"] * scale).astype(jnp.float32)
    wkv = jnp.concatenate([params["wk"], params["wv"]], axis=1).astype(jnp.bfloat16)
    bkv = jnp.concatenate([params["bk"], params["bv"]], axis=1).astype(jnp.float32)
    wo = params["wo"].astype(jnp.bfloat16)
    post = jnp.concatenate(
        [params["bo"], params["gamma"], params["beta"]], axis=0).astype(jnp.float32)

    head_of_lane = jnp.arange(E, dtype=jnp.int32) // head_dim
    H = (head_of_lane[:, None] ==
         jnp.arange(num_heads, dtype=jnp.int32)[None, :]).astype(jnp.bfloat16)   # (E, heads)
    HT = H.T                                                                      # (heads, E)

    # (B, 1, P) so the streamed prototype block (tb, 1, P) keeps its last two
    # dims equal to the full array dims (BlockSpec tiling rule).
    proto3 = prototype_feat.reshape(B, 1, P)

    kernel = partial(_enhancer_kernel, eps=eps)

    def resident(shape):
        # Constant index_map -> block fetched once, stays VMEM-resident across
        # all grid steps (no per-step weight re-DMA).
        n = len(shape)
        return pl.BlockSpec(shape, lambda i, n=n: (0,) * n)

    return pl.pallas_call(
        kernel,
        out_shape=jax.ShapeDtypeStruct((B, N, D), query_feat.dtype),
        grid=grid,
        in_specs=[
            pl.BlockSpec((tb, 1, P), lambda i: (i, 0, 0)),   # prototype (streamed)
            pl.BlockSpec((tb, N, D), lambda i: (i, 0, 0)),   # query_feat (streamed)
            resident((P, E)), resident((1, E)),              # Q projection (scale folded)
            resident((D, 2 * E)), resident((1, 2 * E)),      # fused K/V projection
            resident((E, D)),                                # output projection
            resident((3, D)),                                # out-proj bias, gamma, beta
            resident((E, num_heads)),                        # H  (head membership)
            resident((num_heads, E)),                        # HT (head membership^T)
        ],
        out_specs=pl.BlockSpec((tb, N, D), lambda i: (i, 0, 0)),
        compiler_params=pltpu.CompilerParams(
            dimension_semantics=("parallel",),               # megacore-shardable on v7x
        ),
    )(proto3, query_feat, wq, bq, wkv, bkv, wo, post, H, HT)


def reference(prototype_feat, query_feat, params, num_heads, eps=1e-5):
    """Pure-JAX reference mirroring the PyTorch forward pass (f32, HIGHEST)."""
    B, P = prototype_feat.shape
    _, N, D = query_feat.shape
    E = params["wq"].shape[1]
    hd = E // num_heads
    hi = jax.lax.Precision.HIGHEST
    q = jnp.dot(prototype_feat, params["wq"], precision=hi) + params["bq"][0]
    q = jnp.broadcast_to(q[:, None, :], (B, N, E))
    k = jnp.dot(query_feat, params["wk"], precision=hi) + params["bk"][0]
    v = jnp.dot(query_feat, params["wv"], precision=hi) + params["bv"][0]
    qh = q.reshape(B, N, num_heads, hd).transpose(0, 2, 1, 3)
    kh = k.reshape(B, N, num_heads, hd).transpose(0, 2, 1, 3)
    vh = v.reshape(B, N, num_heads, hd).transpose(0, 2, 1, 3)
    s = jnp.einsum("bhqd,bhkd->bhqk", qh, kh, precision=hi) / hd ** 0.5
    p = jax.nn.softmax(s, axis=-1)
    o = jnp.einsum("bhqk,bhkd->bhqd", p, vh, precision=hi)
    o = o.transpose(0, 2, 1, 3).reshape(B, N, E)
    o = jnp.dot(o, params["wo"], precision=hi) + params["bo"][0]
    o = o + query_feat
    mean = o.mean(-1, keepdims=True)
    var = ((o - mean) ** 2).mean(-1, keepdims=True)
    o = (o - mean) / jnp.sqrt(var + eps)
    return o * params["gamma"][0] + params["beta"][0]


if __name__ == "__main__":
    # Small shapes consistent with the module: B=2 batches, N=8 query tokens,
    # prototype_dim=128, query_dim=128, embed_dim=128, num_heads=4.
    B, N = 2, 8
    P_DIM, Q_DIM, E_DIM, HEADS = 128, 128, 128, 4

    key = jax.random.PRNGKey(0)
    ks = jax.random.split(key, 12)

    params = {
        "wq": jax.random.normal(ks[0], (P_DIM, E_DIM), jnp.float32) * 0.05,
        "bq": jax.random.normal(ks[1], (1, E_DIM), jnp.float32) * 0.01,
        "wk": jax.random.normal(ks[2], (Q_DIM, E_DIM), jnp.float32) * 0.05,
        "bk": jax.random.normal(ks[3], (1, E_DIM), jnp.float32) * 0.01,
        "wv": jax.random.normal(ks[4], (Q_DIM, E_DIM), jnp.float32) * 0.05,
        "bv": jax.random.normal(ks[5], (1, E_DIM), jnp.float32) * 0.01,
        "wo": jax.random.normal(ks[6], (E_DIM, Q_DIM), jnp.float32) * 0.05,
        "bo": jax.random.normal(ks[7], (1, Q_DIM), jnp.float32) * 0.01,
        "gamma": jnp.ones((1, Q_DIM), jnp.float32),
        "beta": jnp.zeros((1, Q_DIM), jnp.float32),
    }

    prototype_feat = jax.random.normal(ks[8], (B, P_DIM), jnp.float32)
    query_feat = jax.random.normal(ks[9], (B, N, Q_DIM), jnp.float32)

    out = cross_attention_enhancer(prototype_feat, query_feat, params, num_heads=HEADS)
    out = jax.block_until_ready(out)

    ref = reference(prototype_feat, query_feat, params, HEADS)
    assert out.shape == (B, N, Q_DIM)
    max_err = jnp.max(jnp.abs(out - ref))
    # bf16 MXU inputs (f32 accumulation) + approx reciprocal -> looser tolerance.
    assert jnp.allclose(out, ref, rtol=2e-2, atol=2e-2), f"max abs err = {max_err}"

    print("KERNEL_OK")
</pallas_src>

<mosaic_0001>
module attributes {stable_mosaic.version = 11 : i64} {
  func.func @_enhancer_kernel(%arg0: i32, %arg1: memref<1x1x128xf32, #tpu.memory_space<vmem>>, %arg2: memref<1x8x128xf32, #tpu.memory_space<vmem>>, %arg3: memref<128x128xbf16, #tpu.memory_space<vmem>>, %arg4: memref<1x128xf32, #tpu.memory_space<vmem>>, %arg5: memref<128x256xbf16, #tpu.memory_space<vmem>>, %arg6: memref<1x256xf32, #tpu.memory_space<vmem>>, %arg7: memref<128x128xbf16, #tpu.memory_space<vmem>>, %arg8: memref<3x128xf32, #tpu.memory_space<vmem>>, %arg9: memref<128x4xbf16, #tpu.memory_space<vmem>>, %arg10: memref<4x128xbf16, #tpu.memory_space<vmem>>, %arg11: memref<1x8x128xf32, #tpu.memory_space<vmem>>) attributes {dimension_semantics = [#tpu.dimension_semantics<parallel>], iteration_bounds = array<i64: 2>, scalar_prefetch = 0 : i64, scratch_operands = 0 : i64, tpu.core_type = #tpu.core_type<tc>, window_params = [{transform_indices = @transform_0, window_bounds = array<i64: 1, 1, 128>}, {transform_indices = @transform_1, window_bounds = array<i64: 1, 8, 128>}, {pipeline_mode = #tpu.pipeline_mode<synchronous>, transform_indices = @transform_2, window_bounds = array<i64: 128, 128>}, {pipeline_mode = #tpu.pipeline_mode<synchronous>, transform_indices = @transform_3, window_bounds = array<i64: 1, 128>}, {pipeline_mode = #tpu.pipeline_mode<synchronous>, transform_indices = @transform_4, window_bounds = array<i64: 128, 256>}, {pipeline_mode = #tpu.pipeline_mode<synchronous>, transform_indices = @transform_5, window_bounds = array<i64: 1, 256>}, {pipeline_mode = #tpu.pipeline_mode<synchronous>, transform_indices = @transform_6, window_bounds = array<i64: 128, 128>}, {pipeline_mode = #tpu.pipeline_mode<synchronous>, transform_indices = @transform_7, window_bounds = array<i64: 3, 128>}, {pipeline_mode = #tpu.pipeline_mode<synchronous>, transform_indices = @transform_8, window_bounds = array<i64: 128, 4>}, {pipeline_mode = #tpu.pipeline_mode<synchronous>, transform_indices = @transform_9, window_bounds = array<i64: 4, 128>}, {transform_indices = @transform_10, window_bounds = array<i64: 1, 8, 128>}]} {
    %c0 = arith.constant 0 : index
    %c0_0 = arith.constant 0 : index
    %c0_1 = arith.constant 0 : index
    %0 = vector.load %arg2[%c0, %c0_0, %c0_1] : memref<1x8x128xf32, #tpu.memory_space<vmem>>, vector<1x8x128xf32>
    %1 = arith.truncf %0 : vector<1x8x128xf32> to vector<1x8x128xbf16>
    %c0_2 = arith.constant 0 : index
    %c0_3 = arith.constant 0 : index
    %c0_4 = arith.constant 0 : index
    %2 = vector.load %arg1[%c0_2, %c0_3, %c0_4] : memref<1x1x128xf32, #tpu.memory_space<vmem>>, vector<1x1x128xf32>
    %3 = vector.shape_cast %2 : vector<1x1x128xf32> to vector<1x128xf32>
    %4 = arith.truncf %3 : vector<1x128xf32> to vector<1x128xbf16>
    %c0_5 = arith.constant 0 : index
    %c0_6 = arith.constant 0 : index
    %5 = vector.load %arg3[%c0_5, %c0_6] : memref<128x128xbf16, #tpu.memory_space<vmem>>, vector<128x128xbf16>
    %cst = arith.constant dense<0.000000e+00> : vector<1x128xf32>
    %6 = tpu.matmul %4, %5, %cst {dimension_numbers = #tpu.dot_dimension_numbers<[1], [0], [0], [1], [0, 0, 1, 1], [], []>} : vector<1x128xbf16>, vector<128x128xbf16>, vector<1x128xf32> -> vector<1x128xf32>
    %c0_7 = arith.constant 0 : index
    %c0_8 = arith.constant 0 : index
    %7 = vector.load %arg4[%c0_7, %c0_8] : memref<1x128xf32, #tpu.memory_space<vmem>>, vector<1x128xf32>
    %8 = arith.addf %6, %7 : vector<1x128xf32>
    %9 = vector.shape_cast %1 : vector<1x8x128xbf16> to vector<8x128xbf16>
    %c0_9 = arith.constant 0 : index
    %c0_10 = arith.constant 0 : index
    %10 = vector.load %arg5[%c0_9, %c0_10] : memref<128x256xbf16, #tpu.memory_space<vmem>>, vector<128x256xbf16>
    %cst_11 = arith.constant dense<0.000000e+00> : vector<8x256xf32>
    %11 = tpu.matmul %9, %10, %cst_11 {dimension_numbers = #tpu.dot_dimension_numbers<[1], [0], [0], [1], [0, 0, 1, 1], [], []>} : vector<8x128xbf16>, vector<128x256xbf16>, vector<8x256xf32> -> vector<8x256xf32>
    %c0_12 = arith.constant 0 : index
    %c0_13 = arith.constant 0 : index
    %12 = vector.load %arg6[%c0_12, %c0_13] : memref<1x256xf32, #tpu.memory_space<vmem>>, vector<1x256xf32>
    %13 = vector.broadcast %12 : vector<1x256xf32> to vector<8x256xf32>
    %14 = arith.addf %11, %13 : vector<8x256xf32>
    %15 = vector.extract_strided_slice %14 {offsets = [0, 0], sizes = [8, 128], strides = [1, 1]} : vector<8x256xf32> to vector<8x128xf32>
    %16 = vector.shape_cast %15 : vector<8x128xf32> to vector<1x8x128xf32>
    %17 = vector.extract_strided_slice %14 {offsets = [0, 128], sizes = [8, 128], strides = [1, 1]} : vector<8x256xf32> to vector<8x128xf32>
    %18 = vector.shape_cast %17 : vector<8x128xf32> to vector<1x8x128xf32>
    %19 = vector.shape_cast %8 : vector<1x128xf32> to vector<1x1x128xf32>
    %20 = vector.broadcast %19 : vector<1x1x128xf32> to vector<1x8x128xf32>
    %21 = arith.mulf %20, %16 : vector<1x8x128xf32>
    %22 = arith.truncf %21 : vector<1x8x128xf32> to vector<1x8x128xbf16>
    %23 = vector.shape_cast %22 : vector<1x8x128xbf16> to vector<8x128xbf16>
    %c0_14 = arith.constant 0 : index
    %c0_15 = arith.constant 0 : index
    %24 = vector.load %arg9[%c0_14, %c0_15] : memref<128x4xbf16, #tpu.memory_space<vmem>>, vector<128x4xbf16>
    %cst_16 = arith.constant dense<0.000000e+00> : vector<8x4xf32>
    %25 = tpu.matmul %23, %24, %cst_16 {dimension_numbers = #tpu.dot_dimension_numbers<[1], [0], [0], [1], [0, 0, 1, 1], [], []>} : vector<8x128xbf16>, vector<128x4xbf16>, vector<8x4xf32> -> vector<8x4xf32>
    %26 = vector.shape_cast %25 : vector<8x4xf32> to vector<1x8x4xf32>
    %cst_17 = arith.constant dense<0xFF800000> : vector<1x4xf32>
    %27 = vector.multi_reduction <maximumf>, %26, %cst_17 [1] : vector<1x8x4xf32> to vector<1x4xf32>
    %28 = vector.shape_cast %27 : vector<1x4xf32> to vector<1x1x4xf32>
    %29 = vector.broadcast %28 : vector<1x1x4xf32> to vector<1x8x4xf32>
    %30 = arith.subf %26, %29 : vector<1x8x4xf32>
    %31 = math.exp %30 : vector<1x8x4xf32>
    %32 = arith.truncf %31 : vector<1x8x4xf32> to vector<1x8x4xbf16>
    %33 = vector.shape_cast %32 : vector<1x8x4xbf16> to vector<8x4xbf16>
    %c0_18 = arith.constant 0 : index
    %c0_19 = arith.constant 0 : index
    %34 = vector.load %arg10[%c0_18, %c0_19] : memref<4x128xbf16, #tpu.memory_space<vmem>>, vector<4x128xbf16>
    %cst_20 = arith.constant dense<0.000000e+00> : vector<8x128xf32>
    %35 = tpu.matmul %33, %34, %cst_20 {dimension_numbers = #tpu.dot_dimension_numbers<[1], [0], [0], [1], [0, 0, 1, 1], [], []>} : vector<8x4xbf16>, vector<4x128xbf16>, vector<8x128xf32> -> vector<8x128xf32>
    %36 = vector.shape_cast %35 : vector<8x128xf32> to vector<1x8x128xf32>
    %37 = arith.mulf %36, %18 : vector<1x8x128xf32>
    %cst_21 = arith.constant dense<0.000000e+00> : vector<1x128xf32>
    %38 = vector.multi_reduction <add>, %37, %cst_21 [1] : vector<1x8x128xf32> to vector<1x128xf32>
    %cst_22 = arith.constant dense<0.000000e+00> : vector<1x128xf32>
    %39 = vector.multi_reduction <add>, %36, %cst_22 [1] : vector<1x8x128xf32> to vector<1x128xf32>
    %40 = tpu.reciprocal %39 {approx = true} : vector<1x128xf32> -> vector<1x128xf32>
    %41 = arith.mulf %38, %40 : vector<1x128xf32>
    %c0_23 = arith.constant 0 : index
    %c0_24 = arith.constant 0 : index
    %42 = vector.load %arg8[%c0_23, %c0_24] : memref<3x128xf32, #tpu.memory_space<vmem>>, vector<3x128xf32>
    %43 = arith.truncf %41 : vector<1x128xf32> to vector<1x128xbf16>
    %c0_25 = arith.constant 0 : index
    %c0_26 = arith.constant 0 : index
    %44 = vector.load %arg7[%c0_25, %c0_26] : memref<128x128xbf16, #tpu.memory_space<vmem>>, vector<128x128xbf16>
    %cst_27 = arith.constant dense<0.000000e+00> : vector<1x128xf32>
    %45 = tpu.matmul %43, %44, %cst_27 {dimension_numbers = #tpu.dot_dimension_numbers<[1], [0], [0], [1], [0, 0, 1, 1], [], []>} : vector<1x128xbf16>, vector<128x128xbf16>, vector<1x128xf32> -> vector<1x128xf32>
    %46 = vector.extract_strided_slice %42 {offsets = [0, 0], sizes = [1, 128], strides = [1, 1]} : vector<3x128xf32> to vector<1x128xf32>
    %47 = arith.addf %45, %46 : vector<1x128xf32>
    %48 = vector.shape_cast %47 : vector<1x128xf32> to vector<1x1x128xf32>
    %49 = vector.broadcast %48 : vector<1x1x128xf32> to vector<1x8x128xf32>
    %50 = arith.addf %0, %49 : vector<1x8x128xf32>
    %cst_28 = arith.constant dense<0.000000e+00> : vector<1x8xf32>
    %51 = vector.multi_reduction <add>, %50, %cst_28 [2] : vector<1x8x128xf32> to vector<1x8xf32>
    %52 = vector.shape_cast %51 : vector<1x8xf32> to vector<1x8x1xf32>
    %cst_29 = arith.constant 1.280000e+02 : f32
    %53 = vector.broadcast %cst_29 : f32 to vector<1x8x1xf32>
    %54 = arith.divf %52, %53 : vector<1x8x1xf32>
    %55 = arith.mulf %50, %50 : vector<1x8x128xf32>
    %cst_30 = arith.constant dense<0.000000e+00> : vector<1x8xf32>
    %56 = vector.multi_reduction <add>, %55, %cst_30 [2] : vector<1x8x128xf32> to vector<1x8xf32>
    %57 = vector.shape_cast %56 : vector<1x8xf32> to vector<1x8x1xf32>
    %cst_31 = arith.constant 1.280000e+02 : f32
    %58 = vector.broadcast %cst_31 : f32 to vector<1x8x1xf32>
    %59 = arith.divf %57, %58 : vector<1x8x1xf32>
    %60 = arith.mulf %54, %54 : vector<1x8x1xf32>
    %61 = arith.subf %59, %60 : vector<1x8x1xf32>
    %62 = vector.broadcast %54 : vector<1x8x1xf32> to vector<1x8x128xf32>
    %63 = arith.subf %50, %62 : vector<1x8x128xf32>
    %cst_32 = arith.constant 9.99999974E-6 : f32
    %64 = vector.broadcast %cst_32 : f32 to vector<1x8x1xf32>
    %65 = arith.addf %61, %64 : vector<1x8x1xf32>
    %66 = math.rsqrt %65 : vector<1x8x1xf32>
    %67 = vector.broadcast %66 : vector<1x8x1xf32> to vector<1x8x128xf32>
    %68 = arith.mulf %63, %67 : vector<1x8x128xf32>
    %69 = vector.extract_strided_slice %42 {offsets = [1, 0], sizes = [1, 128], strides = [1, 1]} : vector<3x128xf32> to vector<1x128xf32>
    %70 = vector.shape_cast %69 : vector<1x128xf32> to vector<1x1x128xf32>
    %71 = vector.broadcast %70 : vector<1x1x128xf32> to vector<1x8x128xf32>
    %72 = arith.mulf %68, %71 : vector<1x8x128xf32>
    %73 = vector.extract_strided_slice %42 {offsets = [2, 0], sizes = [1, 128], strides = [1, 1]} : vector<3x128xf32> to vector<1x128xf32>
    %74 = vector.shape_cast %73 : vector<1x128xf32> to vector<1x1x128xf32>
    %75 = vector.broadcast %74 : vector<1x1x128xf32> to vector<1x8x128xf32>
    %76 = arith.addf %72, %75 : vector<1x8x128xf32>
    %c0_33 = arith.constant 0 : index
    %c0_34 = arith.constant 0 : index
    %c0_35 = arith.constant 0 : index
    %77 = vector.load %arg11[%c0_33, %c0_34, %c0_35] : memref<1x8x128xf32, #tpu.memory_space<vmem>>, vector<1x8x128xf32>
    tpu.vector_store %arg11[%c0_33, %c0_34, %c0_35], %76 {strides = array<i32>} : memref<1x8x128xf32, #tpu.memory_space<vmem>>, vector<1x8x128xf32>,
    return
  }
  func.func @transform_0(%arg0: i32) -> (i32, i32, i32) {
    %c0_i32 = arith.constant 0 : i32
    %c0_i32_0 = arith.constant 0 : i32
    %c0_i32_1 = arith.constant 0 : i32
    return %arg0, %c0_i32, %c0_i32_0 : i32, i32, i32
  }
  func.func @transform_1(%arg0: i32) -> (i32, i32, i32) {
    %c0_i32 = arith.constant 0 : i32
    %c0_i32_0 = arith.constant 0 : i32
    %c0_i32_1 = arith.constant 0 : i32
    return %arg0, %c0_i32, %c0_i32_0 : i32, i32, i32
  }
  func.func @transform_2(%arg0: i32) -> (i32, i32) {
    %c0_i32 = arith.constant 0 : i32
    %c0_i32_0 = arith.constant 0 : i32
    %c0_i32_1 = arith.constant 0 : i32
    return %c0_i32, %c0_i32_0 : i32, i32
  }
  func.func @transform_3(%arg0: i32) -> (i32, i32) {
    %c0_i32 = arith.constant 0 : i32
    %c0_i32_0 = arith.constant 0 : i32
    %c0_i32_1 = arith.constant 0 : i32
    return %c0_i32, %c0_i32_0 : i32, i32
  }
  func.func @transform_4(%arg0: i32) -> (i32, i32) {
    %c0_i32 = arith.constant 0 : i32
    %c0_i32_0 = arith.constant 0 : i32
    %c0_i32_1 = arith.constant 0 : i32
    return %c0_i32, %c0_i32_0 : i32, i32
  }
  func.func @transform_5(%arg0: i32) -> (i32, i32) {
    %c0_i32 = arith.constant 0 : i32
    %c0_i32_0 = arith.constant 0 : i32
    %c0_i32_1 = arith.constant 0 : i32
    return %c0_i32, %c0_i32_0 : i32, i32
  }
  func.func @transform_6(%arg0: i32) -> (i32, i32) {
    %c0_i32 = arith.constant 0 : i32
    %c0_i32_0 = arith.constant 0 : i32
    %c0_i32_1 = arith.constant 0 : i32
    return %c0_i32, %c0_i32_0 : i32, i32
  }
  func.func @transform_7(%arg0: i32) -> (i32, i32) {
    %c0_i32 = arith.constant 0 : i32
    %c0_i32_0 = arith.constant 0 : i32
    %c0_i32_1 = arith.constant 0 : i32
    return %c0_i32, %c0_i32_0 : i32, i32
  }
  func.func @transform_8(%arg0: i32) -> (i32, i32) {
    %c0_i32 = arith.constant 0 : i32
    %c0_i32_0 = arith.constant 0 : i32
    %c0_i32_1 = arith.constant 0 : i32
    return %c0_i32, %c0_i32_0 : i32, i32
  }
  func.func @transform_9(%arg0: i32) -> (i32, i32) {
    %c0_i32 = arith.constant 0 : i32
    %c0_i32_0 = arith.constant 0 : i32
    %c0_i32_1 = arith.constant 0 : i32
    return %c0_i32, %c0_i32_0 : i32, i32
  }
  func.func @transform_10(%arg0: i32) -> (i32, i32, i32) {
    %c0_i32 = arith.constant 0 : i32
    %c0_i32_0 = arith.constant 0 : i32
    %c0_i32_1 = arith.constant 0 : i32
    return %arg0, %c0_i32, %c0_i32_0 : i32, i32, i32
  }
}

</mosaic_0001>

<llo_original>
// kernel: tpu_custom_call.1
$region0: #{tpu_custom_call.1}
  #allocation0 [shape = 'u32[]', space=smem, size = 0x4, offset = 0x4, fixed_abs, tag = 'smem constant byte address 0x4 - core index']
  #allocation1 [shape = 'u32[72,128]{1,0:T(1,128)}', space=vmem, size = 0x9000, scoped, tag = 'internal scratch']
  %s0 = inlined_call_operand.vmem [shape: f32[2,1,128], index: 0, kind: input, shape index: {}]
  %s1 = inlined_call_operand.hbm [shape: f32[2,8,128], index: 1, kind: input, shape index: {}]
  %s2 = inlined_call_operand.vmem [shape: bf16[128,128], index: 2, kind: input, shape index: {}]
  %s3 = inlined_call_operand.hbm [shape: f32[1,128], index: 3, kind: input, shape index: {}]
  %s4 = inlined_call_operand.hbm [shape: bf16[128,256], index: 4, kind: input, shape index: {}]
  %s5 = inlined_call_operand.hbm [shape: f32[1,256], index: 5, kind: input, shape index: {}]
  %s6 = inlined_call_operand.hbm [shape: bf16[128,128], index: 6, kind: input, shape index: {}]
  %s7 = inlined_call_operand.vmem [shape: f32[3,128], index: 7, kind: input, shape index: {}]
  %s8 = inlined_call_operand.vmem [shape: bf16[128,4], index: 8, kind: input, shape index: {}]
  %s9 = inlined_call_operand.vmem [shape: bf16[4,128], index: 9, kind: input, shape index: {}]
  %s10 = inlined_call_operand.hbm [shape: f32[2,8,128], index: 10, kind: output, shape index: {}]
  %s11 = sld [smem:[#allocation0]]
  $region93: #{tpu_custom_call.1} parent=0
    _
  %s13 = ssub.s32 1, %s11
  %s14 = scalar_select 0, %s13, %s11
  $region1: #{tpu_custom_call.1} parent=0
    #allocation2 [shape = 'u8[8192]{0}', space=vmem, size = 0x2000, scoped, tag = 'input window, operand 1']
    #allocation3 [shape = 's32[2]{0}', space=sflag, size = 0x8, scoped, tag = 'scoped memory for tpu_custom_call.1']
    #allocation4 [shape = 's32[2]{0}', space=sflag, size = 0x8, scoped, tag = 'scoped memory for tpu_custom_call.1']
    #allocation5 [shape = 'u8[512]{0}', space=vmem, size = 0x400, scoped, tag = 'input window, operand 3, single buffered']
    #allocation6 [shape = 's32[1]{0}', space=sflag, size = 0x4, scoped, tag = 'scoped memory for tpu_custom_call.1']
    #allocation7 [shape = 'u8[65536]{0}', space=vmem, size = 0x10000, scoped, tag = 'input window, operand 4, single buffered']
    #allocation8 [shape = 'u8[1024]{0}', space=vmem, size = 0x400, scoped, tag = 'input window, operand 5, single buffered']
    #allocation9 [shape = 's32[1]{0}', space=sflag, size = 0x4, scoped, tag = 'scoped memory for tpu_custom_call.1']
    #allocation10 [shape = 'u8[32768]{0}', space=vmem, size = 0x8000, scoped, tag = 'input window, operand 6, single buffered']
    #allocation11 [shape = 'u8[8192]{0}', space=vmem, size = 0x2000, scoped, tag = 'output window, operand 0']
    %15 = vsyncpa [#allocation3], 0
    %s16 = scalar_lea.sflag [#allocation3], 1
    %17 = vsyncpa %s16, 0
    %18 = vsyncpa [#allocation6], 0
    %19 = vsyncpa [#allocation9], 0
    %20 = vsyncpa [#allocation4], 0
    %s21 = scalar_lea.sflag [#allocation4], 1
    %22 = vsyncpa %s21, 0
    loop: start=0, step=1, limit=4
    $region2: #{tpu_custom_call.1} parent=1 // loop_pre_header
      _
    $region3: #{tpu_custom_call.1} parent=1 // loop_header
      %s24 = sphi 0, %s28
      %p25 = scmp.ge.s32.totalorder %s24, 4
      %s34 = sphi 0, %s36
      %s37 = sphi 0, %s34
      %s38 = sphi 0, %s37
      %s54 = sphi 0, %s38
      %s60 = sphi 0, %s62
      %s63 = sphi 0, %s60
      %s64 = sphi 0, %s63
      %s80 = sphi 0, %s64
      %s84 = sphi 0, %s84
      %s86 = sphi 0, %s84
      %s87 = sphi 0, %s86
      %s101 = sphi 0, %s87
      %s105 = sphi 0, %s105
      %s107 = sphi 0, %s105
      %s108 = sphi 0, %s107
      %s122 = sphi 0, %s108
      %s126 = sphi 0, %s126
      %s128 = sphi 0, %s126
      %s129 = sphi 0, %s128
      %s143 = sphi 0, %s129
      %s147 = sphi 0, %s147
      %s149 = sphi 0, %s147
      %s150 = sphi 0, %s149
      %s164 = sphi 0, %s150
      %s168 = sphi 0, %s168
      %s170 = sphi 0, %s168
      %s171 = sphi 0, %s170
      %s185 = sphi 0, %s171
      %s189 = sphi 0, %s189
      %s191 = sphi 0, %s189
      %s192 = sphi 0, %s191
      %s206 = sphi 0, %s192
      %s210 = sphi 0, %s210
      %s212 = sphi 0, %s210
      %s213 = sphi 0, %s212
      %s227 = sphi 0, %s213
      %s231 = sphi 0, %s231
      %s233 = sphi 0, %s231
      %s234 = sphi 0, %s233
      %s248 = sphi 0, %s234
      %s254 = sphi 0, %s256
      %s257 = sphi 0, %s254
      %s258 = sphi 0, %s257
      %s274 = sphi 0, %s258
    $region4: #{tpu_custom_call.1} parent=1 // loop_header_branch
      %27 = sbr.rel (%p25) target = $region8
    $region5: #{tpu_custom_call.1} parent=1 // loop_body
      %s29 = ssub.s32 %s24, 1
      %s30 = ssub.s32 %s24, 2
      %s31 = sadd.s32 %s24, 1
      %s32 = ssub.s32 %s24, %s31
      %p33 = scmp.eq.s32.totalorder %s32, 0
      %s35 = sadd.s32 %s34, 1
      %s36 = scalar_select %p33, %s34, %s35
      %p39 = pneg %p33
      %p40 = scmp.eq.s32.totalorder %s24, 1
      %p41 = por %p39, %p40
      %p42 = scmp.ne.s32.totalorder %s34, %s37
      %p43 = scmp.eq.s32.totalorder %s24, 0
      %p44 = por %p42, %p43
      %p45 = scmp.ne.s32.totalorder %s34, %s37
      %p46 = scmp.eq.s32.totalorder %s29, 1
      %p47 = por %p45, %p46
      %p48 = scmp.ne.s32.totalorder %s37, %s38
      %p49 = scmp.eq.s32.totalorder %s29, 0
      %p50 = por %p48, %p49
      %p51 = scmp.ne.s32.totalorder %s37, %s38
      %p52 = scmp.eq.s32.totalorder %s30, 1
      %p53 = por %p51, %p52
      %p55 = scmp.ne.s32.totalorder %s38, %s54
      %p56 = scmp.eq.s32.totalorder %s30, 0
      %p57 = por %p55, %p56
      %s58 = ssub.s32 %s24, %s31
      %p59 = scmp.eq.s32.totalorder %s58, 0
      %s61 = sadd.s32 %s60, 1
      %s62 = scalar_select %p59, %s60, %s61
      %p65 = pneg %p59
      %p66 = scmp.eq.s32.totalorder %s24, 1
      %p67 = por %p65, %p66
      %p68 = scmp.ne.s32.totalorder %s60, %s63
      %p69 = scmp.eq.s32.totalorder %s24, 0
      %p70 = por %p68, %p69
      %p71 = scmp.ne.s32.totalorder %s60, %s63
      %p72 = scmp.eq.s32.totalorder %s29, 1
      %p73 = por %p71, %p72
      %p74 = scmp.ne.s32.totalorder %s63, %s64
      %p75 = scmp.eq.s32.totalorder %s29, 0
      %p76 = por %p74, %p75
      %p77 = scmp.ne.s32.totalorder %s63, %s64
      %p78 = scmp.eq.s32.totalorder %s30, 1
      %p79 = por %p77, %p78
      %p81 = scmp.ne.s32.totalorder %s64, %s80
      %p82 = scmp.eq.s32.totalorder %s30, 0
      %p83 = por %p81, %p82
      %s85 = sadd.s32 %s84, 1
      %p88 = scmp.eq.s32.totalorder %s24, 1
      %p89 = scmp.ne.s32.totalorder %s84, %s86
      %p90 = scmp.eq.s32.totalorder %s24, 0
      %p91 = por %p89, %p90
      %p92 = scmp.ne.s32.totalorder %s84, %s86
      %p93 = scmp.eq.s32.totalorder %s29, 1
      %p94 = por %p92, %p93
      %p95 = scmp.ne.s32.totalorder %s86, %s87
      %p96 = scmp.eq.s32.totalorder %s29, 0
      %p97 = por %p95, %p96
      %p98 = scmp.ne.s32.totalorder %s86, %s87
      %p99 = scmp.eq.s32.totalorder %s30, 1
      %p100 = por %p98, %p99
      %p102 = scmp.ne.s32.totalorder %s87, %s101
      %p103 = scmp.eq.s32.totalorder %s30, 0
      %p104 = por %p102, %p103
      %s106 = sadd.s32 %s105, 1
      %p109 = scmp.eq.s32.totalorder %s24, 1
      %p110 = scmp.ne.s32.totalorder %s105, %s107
      %p111 = scmp.eq.s32.totalorder %s24, 0
      %p112 = por %p110, %p111
      %p113 = scmp.ne.s32.totalorder %s105, %s107
      %p114 = scmp.eq.s32.totalorder %s29, 1
      %p115 = por %p113, %p114
      %p116 = scmp.ne.s32.totalorder %s107, %s108
      %p117 = scmp.eq.s32.totalorder %s29, 0
      %p118 = por %p116, %p117
      %p119 = scmp.ne.s32.totalorder %s107, %s108
      %p120 = scmp.eq.s32.totalorder %s30, 1
      %p121 = por %p119, %p120
      %p123 = scmp.ne.s32.totalorder %s108, %s122
      %p124 = scmp.eq.s32.totalorder %s30, 0
      %p125 = por %p123, %p124
      %s127 = sadd.s32 %s126, 1
      %p130 = scmp.eq.s32.totalorder %s24, 1
      %p131 = scmp.ne.s32.totalorder %s126, %s128
      %p132 = scmp.eq.s32.totalorder %s24, 0
      %p133 = por %p131, %p132
      %p134 = scmp.ne.s32.totalorder %s126, %s128
      %p135 = scmp.eq.s32.totalorder %s29, 1
      %p136 = por %p134, %p135
      %p137 = scmp.ne.s32.totalorder %s128, %s129
      %p138 = scmp.eq.s32.totalorder %s29, 0
      %p139 = por %p137, %p138
      %p140 = scmp.ne.s32.totalorder %s128, %s129
      %p141 = scmp.eq.s32.totalorder %s30, 1
      %p142 = por %p140, %p141
      %p144 = scmp.ne.s32.totalorder %s129, %s143
      %p145 = scmp.eq.s32.totalorder %s30, 0
      %p146 = por %p144, %p145
      %s148 = sadd.s32 %s147, 1
      %p151 = scmp.eq.s32.totalorder %s24, 1
      %p152 = scmp.ne.s32.totalorder %s147, %s149
      %p153 = scmp.eq.s32.totalorder %s24, 0
      %p154 = por %p152, %p153
      %p155 = scmp.ne.s32.totalorder %s147, %s149
      %p156 = scmp.eq.s32.totalorder %s29, 1
      %p157 = por %p155, %p156
      %p158 = scmp.ne.s32.totalorder %s149, %s150
      %p159 = scmp.eq.s32.totalorder %s29, 0
      %p160 = por %p158, %p159
      %p161 = scmp.ne.s32.totalorder %s149, %s150
      %p162 = scmp.eq.s32.totalorder %s30, 1
      %p163 = por %p161, %p162
      %p165 = scmp.ne.s32.totalorder %s150, %s164
      %p166 = scmp.eq.s32.totalorder %s30, 0
      %p167 = por %p165, %p166
      %s169 = sadd.s32 %s168, 1
      %p172 = scmp.eq.s32.totalorder %s24, 1
      %p173 = scmp.ne.s32.totalorder %s168, %s170
      %p174 = scmp.eq.s32.totalorder %s24, 0
      %p175 = por %p173, %p174
      %p176 = scmp.ne.s32.totalorder %s168, %s170
      %p177 = scmp.eq.s32.totalorder %s29, 1
      %p178 = por %p176, %p177
      %p179 = scmp.ne.s32.totalorder %s170, %s171
      %p180 = scmp.eq.s32.totalorder %s29, 0
      %p181 = por %p179, %p180
      %p182 = scmp.ne.s32.totalorder %s170, %s171
      %p183 = scmp.eq.s32.totalorder %s30, 1
      %p184 = por %p182, %p183
      %p186 = scmp.ne.s32.totalorder %s171, %s185
      %p187 = scmp.eq.s32.totalorder %s30, 0
      %p188 = por %p186, %p187
      %s190 = sadd.s32 %s189, 1
      %p193 = scmp.eq.s32.totalorder %s24, 1
      %p194 = scmp.ne.s32.totalorder %s189, %s191
      %p195 = scmp.eq.s32.totalorder %s24, 0
      %p196 = por %p194, %p195
      %p197 = scmp.ne.s32.totalorder %s189, %s191
      %p198 = scmp.eq.s32.totalorder %s29, 1
      %p199 = por %p197, %p198
      %p200 = scmp.ne.s32.totalorder %s191, %s192
      %p201 = scmp.eq.s32.totalorder %s29, 0
      %p202 = por %p200, %p201
      %p203 = scmp.ne.s32.totalorder %s191, %s192
      %p204 = scmp.eq.s32.totalorder %s30, 1
      %p205 = por %p203, %p204
      %p207 = scmp.ne.s32.totalorder %s192, %s206
      %p208 = scmp.eq.s32.totalorder %s30, 0
      %p209 = por %p207, %p208
      %s211 = sadd.s32 %s210, 1
      %p214 = scmp.eq.s32.totalorder %s24, 1
      %p215 = scmp.ne.s32.totalorder %s210, %s212
      %p216 = scmp.eq.s32.totalorder %s24, 0
      %p217 = por %p215, %p216
      %p218 = scmp.ne.s32.totalorder %s210, %s212
      %p219 = scmp.eq.s32.totalorder %s29, 1
      %p220 = por %p218, %p219
      %p221 = scmp.ne.s32.totalorder %s212, %s213
      %p222 = scmp.eq.s32.totalorder %s29, 0
      %p223 = por %p221, %p222
      %p224 = scmp.ne.s32.totalorder %s212, %s213
      %p225 = scmp.eq.s32.totalorder %s30, 1
      %p226 = por %p224, %p225
      %p228 = scmp.ne.s32.totalorder %s213, %s227
      %p229 = scmp.eq.s32.totalorder %s30, 0
      %p230 = por %p228, %p229
      %s232 = sadd.s32 %s231, 1
      %p235 = scmp.eq.s32.totalorder %s24, 1
      %p236 = scmp.ne.s32.totalorder %s231, %s233
      %p237 = scmp.eq.s32.totalorder %s24, 0
      %p238 = por %p236, %p237
      %p239 = scmp.ne.s32.totalorder %s231, %s233
      %p240 = scmp.eq.s32.totalorder %s29, 1
      %p241 = por %p239, %p240
      %p242 = scmp.ne.s32.totalorder %s233, %s234
      %p243 = scmp.eq.s32.totalorder %s29, 0
      %p244 = por %p242, %p243
      %p245 = scmp.ne.s32.totalorder %s233, %s234
      %p246 = scmp.eq.s32.totalorder %s30, 1
      %p247 = por %p245, %p246
      %p249 = scmp.ne.s32.totalorder %s234, %s248
      %p250 = scmp.eq.s32.totalorder %s30, 0
      %p251 = por %p249, %p250
      %s252 = ssub.s32 %s24, %s31
      %p253 = scmp.eq.s32.totalorder %s252, 0
      %s255 = sadd.s32 %s254, 1
      %s256 = scalar_select %p253, %s254, %s255
      %p259 = pneg %p253
      %p260 = scmp.eq.s32.totalorder %s24, 1
      %p261 = por %p259, %p260
      %p262 = scmp.ne.s32.totalorder %s254, %s257
      %p263 = scmp.eq.s32.totalorder %s24, 0
      %p264 = por %p262, %p263
      %p265 = scmp.ne.s32.totalorder %s254, %s257
      %p266 = scmp.eq.s32.totalorder %s29, 1
      %p267 = por %p265, %p266
      %p268 = scmp.ne.s32.totalorder %s257, %s258
      %p269 = scmp.eq.s32.totalorder %s29, 0
      %p270 = por %p268, %p269
      %p271 = scmp.ne.s32.totalorder %s257, %s258
      %p272 = scmp.eq.s32.totalorder %s30, 1
      %p273 = por %p271, %p272
      %p275 = scmp.ne.s32.totalorder %s258, %s274
      %p276 = scmp.eq.s32.totalorder %s30, 0
      %p277 = por %p275, %p276
      %p278 = scmp.le.s32.totalorder 1, %s24
      %p279 = scmp.lt.s32.totalorder %s24, 3
      %p280 = pnand %p278, %p279
      %p281 = pneg %p280
      // Predicated region
      $region9: #{tpu_custom_call.1} parent=5 // pred_check
        _
      $region10: #{tpu_custom_call.1} parent=5 // pred_check_branch
        %283 = sbr.rel (%p280) target = $region12
      $region11: #{tpu_custom_call.1} parent=5 // pred_region
        %s284 = ssub.s32 %s24, 1
        // Predicated region
        $region13: #{tpu_custom_call.1} parent=11 // pred_check
          %p285 = pneg %p97
        $region14: #{tpu_custom_call.1} parent=11 // pred_check_branch
          %287 = sbr.rel (%p285) target = $region16
        $region15: #{tpu_custom_call.1} parent=11 // pred_region
          _
        $region16: #{tpu_custom_call.1} parent=11 // pred_fallthru
          _
        // Predicated region
        $region17: #{tpu_custom_call.1} parent=11 // pred_check
          %p288 = pneg %p118
        $region18: #{tpu_custom_call.1} parent=11 // pred_check_branch
          %290 = sbr.rel (%p288) target = $region20
        $region19: #{tpu_custom_call.1} parent=11 // pred_region
          %292 = vsyncadd [#allocation6], 0
          %s294 = sshll.u32 %s3, 4
          %s295 = int_to_ptr.hbm [resolvable:$true] %s294
          %s296 = sshll.u32 [#allocation5], 4
          %s297 = int_to_ptr.vmem [resolvable:$true] %s296
          %299 = dma.hbm_to_vmem [thread:$0]  %s295, 16, %s297, [#allocation6]
        $region20: #{tpu_custom_call.1} parent=11 // pred_fallthru
          _
        // Predicated region
        $region21: #{tpu_custom_call.1} parent=11 // pred_check
          %p300 = pneg %p139
        $region22: #{tpu_custom_call.1} parent=11 // pred_check_branch
          %302 = sbr.rel (%p300) target = $region24
        $region23: #{tpu_custom_call.1} parent=11 // pred_region
          %304 = vsyncadd [#allocation6], 0
          %s305 = sshll.u32 %s4, 4
          %s306 = int_to_ptr.hbm [resolvable:$true] %s305
          %s307 = sshll.u32 [#allocation7], 4
          %s308 = int_to_ptr.vmem [resolvable:$true] %s307
          %313 = dma.hbm_to_vmem [thread:$0]  %s306, 2048, %s308, [#allocation6], 128, 128, 8
        $region24: #{tpu_custom_call.1} parent=11 // pred_fallthru
          _
        // Predicated region
        $region25: #{tpu_custom_call.1} parent=11 // pred_check
          %p314 = pneg %p160
        $region26: #{tpu_custom_call.1} parent=11 // pred_check_branch
          %316 = sbr.rel (%p314) target = $region28
        $region27: #{tpu_custom_call.1} parent=11 // pred_region
          %318 = vsyncadd [#allocation9], 0
          %s320 = sshll.u32 %s5, 4
          %s321 = int_to_ptr.hbm [resolvable:$true] %s320
          %s322 = sshll.u32 [#allocation8], 4
          %s323 = int_to_ptr.vmem [resolvable:$true] %s322
          %325 = dma.hbm_to_vmem [thread:$0]  %s321, 32, %s323, [#allocation9]
        $region28: #{tpu_custom_call.1} parent=11 // pred_fallthru
          _
        // Predicated region
        $region29: #{tpu_custom_call.1} parent=11 // pred_check
          %p326 = pneg %p181
        $region30: #{tpu_custom_call.1} parent=11 // pred_check_branch
          %328 = sbr.rel (%p326) target = $region32
        $region31: #{tpu_custom_call.1} parent=11 // pred_region
          %330 = vsyncadd [#allocation9], 0
          %s331 = sshll.u32 %s6, 4
          %s332 = int_to_ptr.hbm [resolvable:$true] %s331
          %s333 = sshll.u32 [#allocation10], 4
          %s334 = int_to_ptr.vmem [resolvable:$true] %s333
          %339 = dma.hbm_to_vmem [thread:$0]  %s332, 1024, %s334, [#allocation9], 64, 64, 4
        $region32: #{tpu_custom_call.1} parent=11 // pred_fallthru
          _
        // Predicated region
        $region33: #{tpu_custom_call.1} parent=11 // pred_check
          %p340 = pneg %p202
        $region34: #{tpu_custom_call.1} parent=11 // pred_check_branch
          %342 = sbr.rel (%p340) target = $region36
        $region35: #{tpu_custom_call.1} parent=11 // pred_region
          _
        $region36: #{tpu_custom_call.1} parent=11 // pred_fallthru
          _
        // Predicated region
        $region37: #{tpu_custom_call.1} parent=11 // pred_check
          %p343 = pneg %p223
        $region38: #{tpu_custom_call.1} parent=11 // pred_check_branch
          %345 = sbr.rel (%p343) target = $region40
        $region39: #{tpu_custom_call.1} parent=11 // pred_region
          _
        $region40: #{tpu_custom_call.1} parent=11 // pred_fallthru
          _
        // Predicated region
        $region41: #{tpu_custom_call.1} parent=11 // pred_check
          %p346 = pneg %p244
        $region42: #{tpu_custom_call.1} parent=11 // pred_check_branch
          %348 = sbr.rel (%p346) target = $region44
        $region43: #{tpu_custom_call.1} parent=11 // pred_region
          _
        $region44: #{tpu_custom_call.1} parent=11 // pred_fallthru
          _
      $region12: #{tpu_custom_call.1} parent=5 // pred_fallthru
        _
      %p349 = scmp.lt.s32.totalorder %s24, 2
      // Predicated region
      $region45: #{tpu_custom_call.1} parent=5 // pred_check
        %p350 = pneg %p349
      $region46: #{tpu_custom_call.1} parent=5 // pred_check_branch
        %352 = sbr.rel (%p350) target = $region48
      $region47: #{tpu_custom_call.1} parent=5 // pred_region
        // Predicated region
        $region49: #{tpu_custom_call.1} parent=47 // pred_check
          %p353 = pneg %p44
        $region50: #{tpu_custom_call.1} parent=47 // pred_check_branch
          %355 = sbr.rel (%p353) target = $region52
        $region51: #{tpu_custom_call.1} parent=47 // pred_region
          %p356 = scmp.lt.s32.totalorder %s24, 1
          %s357 = scalar_select %p356, %s24, 1
          %s358 = scalar_lea.vmem %s0, %s357
        $region52: #{tpu_custom_call.1} parent=47 // pred_fallthru
          _
        // Predicated region
        $region53: #{tpu_custom_call.1} parent=47 // pred_check
          %p359 = pneg %p70
        $region54: #{tpu_custom_call.1} parent=47 // pred_check_branch
          %361 = sbr.rel (%p359) target = $region56
        $region55: #{tpu_custom_call.1} parent=47 // pred_region
          %s362 = sand.u32 %s60, 1
          %s363 = scalar_lea.sflag [#allocation3], %s362
          %s364 = sand.u32 %s60, 1
          %s365 = smul.addr %s364, 8
          %s366 = scalar_lea.vmem [#allocation2], %s365
          %368 = vsyncadd %s363, 0
          %s369 = smul.addr %s24, 8
          %s370 = scalar_lea.hbm %s1, %s369
          %s372 = sshll.u32 %s370, 4
          %s373 = int_to_ptr.hbm [resolvable:$true] %s372
          %s374 = sshll.u32 %s366, 4
          %s375 = int_to_ptr.vmem [resolvable:$true] %s374
          %377 = dma.hbm_to_vmem [thread:$0]  %s373, 128, %s375, %s363
        $region56: #{tpu_custom_call.1} parent=47 // pred_fallthru
          _
      $region48: #{tpu_custom_call.1} parent=5 // pred_fallthru
        _
      %p378 = scmp.le.s32.totalorder 1, %s24
      %p379 = scmp.lt.s32.totalorder %s24, 3
      %p380 = pnand %p378, %p379
      %p381 = pneg %p380
      // Predicated region
      $region57: #{tpu_custom_call.1} parent=5 // pred_check
        _
      $region58: #{tpu_custom_call.1} parent=5 // pred_check_branch
        %383 = sbr.rel (%p380) target = $region60
      $region59: #{tpu_custom_call.1} parent=5 // pred_region
        %s384 = ssub.s32 %s24, 1
        %s385 = sand.u32 %s63, 1
        %s386 = scalar_lea.sflag [#allocation3], %s385
        %s387 = sand.u32 %s63, 1
        %s388 = smul.addr %s387, 8
        %s389 = scalar_lea.vmem [#allocation2], %s388
        // Predicated region
        $region61: #{tpu_custom_call.1} parent=59 // pred_check
          %p390 = pneg %p76
        $region62: #{tpu_custom_call.1} parent=59 // pred_check_branch
          %392 = sbr.rel (%p390) target = $region64
        $region63: #{tpu_custom_call.1} parent=59 // pred_region
          %394 = dma.done %s386, 128
        $region64: #{tpu_custom_call.1} parent=59 // pred_fallthru
          _
        // Predicated region
        $region65: #{tpu_custom_call.1} parent=59 // pred_check
          %p395 = pneg %p118
        $region66: #{tpu_custom_call.1} parent=59 // pred_check_branch
          %397 = sbr.rel (%p395) target = $region68
        $region67: #{tpu_custom_call.1} parent=59 // pred_region
          %399 = dma.done [#allocation6], 16
        $region68: #{tpu_custom_call.1} parent=59 // pred_fallthru
          _
        // Predicated region
        $region69: #{tpu_custom_call.1} parent=59 // pred_check
          %p400 = pneg %p139
        $region70: #{tpu_custom_call.1} parent=59 // pred_check_branch
          %402 = sbr.rel (%p400) target = $region72
        $region71: #{tpu_custom_call.1} parent=59 // pred_region
          %404 = dma.done [#allocation6], 2048
        $region72: #{tpu_custom_call.1} parent=59 // pred_fallthru
          _
        // Predicated region
        $region73: #{tpu_custom_call.1} parent=59 // pred_check
          %p405 = pneg %p160
        $region74: #{tpu_custom_call.1} parent=59 // pred_check_branch
          %407 = sbr.rel (%p405) target = $region76
        $region75: #{tpu_custom_call.1} parent=59 // pred_region
          %409 = dma.done [#allocation9], 32
        $region76: #{tpu_custom_call.1} parent=59 // pred_fallthru
          _
        // Predicated region
        $region77: #{tpu_custom_call.1} parent=59 // pred_check
          %p410 = pneg %p181
        $region78: #{tpu_custom_call.1} parent=59 // pred_check_branch
          %412 = sbr.rel (%p410) target = $region80
        $region79: #{tpu_custom_call.1} parent=59 // pred_region
          %414 = dma.done [#allocation9], 1024
        $region80: #{tpu_custom_call.1} parent=59 // pred_fallthru
          _
        %p415 = scmp.lt.s32.totalorder %s29, 1
        %s416 = scalar_select %p415, %s29, 1
        %s417 = scalar_lea.vmem %s0, %s416
        %p418 = pneg %p50
        %p419 = pneg %p47
        %s420 = sand.u32 %s63, 1
        %s421 = scalar_lea.sflag [#allocation3], %s420
        %s422 = sand.u32 %s63, 1
        %s423 = smul.addr %s422, 8
        %s424 = scalar_lea.vmem [#allocation2], %s423
        %p425 = pneg %p76
        %p426 = pneg %p73
        %p427 = pneg %p97
        %p428 = pneg %p94
        %p429 = pneg %p118
        %p430 = pneg %p115
        %p431 = pneg %p139
        %p432 = pneg %p136
        %p433 = pneg %p160
        %p434 = pneg %p157
        %p435 = pneg %p181
        %p436 = pneg %p178
        %p437 = pneg %p202
        %p438 = pneg %p199
        %p439 = pneg %p223
        %p440 = pneg %p220
        %p441 = pneg %p244
        %p442 = pneg %p241
        %p443 = pneg %p270
        %p444 = pneg %p267
        %s445 = sand.u32 %s257, 1
        %s446 = scalar_lea.sflag [#allocation4], %s445
        %s447 = sand.u32 %s257, 1
        %s448 = smul.addr %s447, 8
        %s449 = scalar_lea.vmem [#allocation11], %s448
        %p450 = scmp.lt.s32.totalorder %s29, 1
        %s451 = scalar_select %p450, %s29, 1
        %s452 = scalar_lea.vmem %s0, %s451
        %v454 = vld [vmem:[%s389] sm:$0xff]
        %v455 = vpack.c.bf16 %v454, %v454
        %v456 = vld [vmem:[%s452] sm:$0x1]
        %v457 = vpack.c.bf16 %v456, %v456
        %v458 = vld [vmem:[%s2] sm:$0xf]
        %v459 = vld [vmem:[%s2 + $0x4] sm:$0xf]
        %v460 = vld [vmem:[%s2 + $0x8] sm:$0xf]
        %v461 = vld [vmem:[%s2 + $0xc] sm:$0xf]
        %v462 = vld [vmem:[%s2 + $0x10] sm:$0xf]
        %v463 = vld [vmem:[%s2 + $0x14] sm:$0xf]
        %v464 = vld [vmem:[%s2 + $0x18] sm:$0xf]
        %v465 = vld [vmem:[%s2 + $0x1c] sm:$0xf]
        %v466 = vld [vmem:[%s2 + $0x20] sm:$0xf]
        %v467 = vld [vmem:[%s2 + $0x24] sm:$0xf]
        %v468 = vld [vmem:[%s2 + $0x28] sm:$0xf]
        %v469 = vld [vmem:[%s2 + $0x2c] sm:$0xf]
        %v470 = vld [vmem:[%s2 + $0x30] sm:$0xf]
        %v471 = vld [vmem:[%s2 + $0x34] sm:$0xf]
        %v472 = vld [vmem:[%s2 + $0x38] sm:$0xf]
        %v473 = vld [vmem:[%s2 + $0x3c] sm:$0xf]
        %v474 = vld [vmem:[#allocation5] sm:$0x1]
        %v491 = vunpack.c.l.b16 %v458
        %v492 = vunpack.c.l.b16 %v459
        %v493 = vunpack.c.l.b16 %v460
        %v494 = vunpack.c.l.b16 %v461
        %v495 = vunpack.c.l.b16 %v462
        %v496 = vunpack.c.l.b16 %v463
        %v497 = vunpack.c.l.b16 %v464
        %v498 = vunpack.c.l.b16 %v465
        %v499 = vunpack.c.l.b16 %v466
        %v500 = vunpack.c.l.b16 %v467
        %v501 = vunpack.c.l.b16 %v468
        %v502 = vunpack.c.l.b16 %v469
        %v503 = vunpack.c.l.b16 %v470
        %v504 = vunpack.c.l.b16 %v471
        %v505 = vunpack.c.l.b16 %v472
        %v506 = vunpack.c.l.b16 %v473
        %v507 = vpack.c.b16 %v492, %v491
        %v508 = vpack.c.b16 %v494, %v493
        %v509 = vpack.c.b16 %v496, %v495
        %v510 = vpack.c.b16 %v498, %v497
        %v511 = vpack.c.b16 %v500, %v499
        %v512 = vpack.c.b16 %v502, %v501
        %v513 = vpack.c.b16 %v504, %v503
        %v514 = vpack.c.b16 %v506, %v505
        %523 = vmatpush.bf16.msra.mxu0 %v514
        %524 = vmatpush.bf16.msra.mxu0 %v513
        %525 = vmatpush.bf16.msra.mxu0 %v512
        %526 = vmatpush.bf16.msra.mxu0 %v511
        %527 = vmatpush.bf16.msra.mxu0 %v510
        %528 = vmatpush.bf16.msra.mxu0 %v509
        %529 = vmatpush.bf16.msra.mxu0 %v508
        %530 = vmatpush.bf16.msra.mxu0 %v507
        %531 = vmatmul.bf16.gmra.mxu0 %v457
        %v532 = vpop.f32.mrf.mxu0
        %v533 = vadd.f32 %v474, %v532
        %v534 = vpop.f32.mrf.mxu0
        %535 = vdwg.mxu0
        %v536 = vld [vmem:[#allocation7] sm:$0xff]
        %v537 = vld [vmem:[#allocation7 + $0x8] sm:$0xff]
        %v538 = vld [vmem:[#allocation7 + $0x10] sm:$0xff]
        %v539 = vld [vmem:[#allocation7 + $0x18] sm:$0xff]
        %v540 = vld [vmem:[#allocation7 + $0x20] sm:$0xff]
        %v541 = vld [vmem:[#allocation7 + $0x28] sm:$0xff]
        %v542 = vld [vmem:[#allocation7 + $0x30] sm:$0xff]
        %v543 = vld [vmem:[#allocation7 + $0x38] sm:$0xff]
        %v544 = vld [vmem:[#allocation7 + $0x40] sm:$0xff]
        %v545 = vld [vmem:[#allocation7 + $0x48] sm:$0xff]
        %v546 = vld [vmem:[#allocation7 + $0x50] sm:$0xff]
        %v547 = vld [vmem:[#allocation7 + $0x58] sm:$0xff]
        %v548 = vld [vmem:[#allocation7 + $0x60] sm:$0xff]
        %v549 = vld [vmem:[#allocation7 + $0x68] sm:$0xff]
        %v550 = vld [vmem:[#allocation7 + $0x70] sm:$0xff]
        %v551 = vld [vmem:[#allocation7 + $0x78] sm:$0xff]
        %v552 = vld [vmem:[#allocation8] sm:$0x3]
        %v554 = vperm.slane %v552, 0
        %v555 = vperm.slane %v552, 1
        %v574 = vunpack.c.l.b16 %v536
        %v575 = vunpack.c.h.b16 %v536
        %v576 = vunpack.c.l.b16 %v537
        %v577 = vunpack.c.h.b16 %v537
        %v578 = vunpack.c.l.b16 %v538
        %v579 = vunpack.c.h.b16 %v538
        %v580 = vunpack.c.l.b16 %v539
        %v581 = vunpack.c.h.b16 %v539
        %v582 = vunpack.c.l.b16 %v540
        %v583 = vunpack.c.h.b16 %v540
        %v584 = vunpack.c.l.b16 %v541
        %v585 = vunpack.c.h.b16 %v541
        %v586 = vunpack.c.l.b16 %v542
        %v587 = vunpack.c.h.b16 %v542
        %v588 = vunpack.c.l.b16 %v543
        %v589 = vunpack.c.h.b16 %v543
        %v590 = vunpack.c.l.b16 %v544
        %v591 = vunpack.c.h.b16 %v544
        %v592 = vunpack.c.l.b16 %v545
        %v593 = vunpack.c.h.b16 %v545
        %v594 = vunpack.c.l.b16 %v546
        %v595 = vunpack.c.h.b16 %v546
        %v596 = vunpack.c.l.b16 %v547
        %v597 = vunpack.c.h.b16 %v547
        %v598 = vunpack.c.l.b16 %v548
        %v599 = vunpack.c.h.b16 %v548
        %v600 = vunpack.c.l.b16 %v549
        %v601 = vunpack.c.h.b16 %v549
        %v602 = vunpack.c.l.b16 %v550
        %v603 = vunpack.c.h.b16 %v550
        %v604 = vunpack.c.l.b16 %v551
        %v605 = vunpack.c.h.b16 %v551
        %v606 = vpack.c.b16 %v576, %v574
        %v607 = vpack.c.b16 %v577, %v575
        %v608 = vpack.c.b16 %v580, %v578
        %v609 = vpack.c.b16 %v581, %v579
        %v610 = vpack.c.b16 %v584, %v582
        %v611 = vpack.c.b16 %v585, %v583
        %v612 = vpack.c.b16 %v588, %v586
        %v613 = vpack.c.b16 %v589, %v587
        %v614 = vpack.c.b16 %v592, %v590
        %v615 = vpack.c.b16 %v593, %v591
        %v616 = vpack.c.b16 %v596, %v594
        %v617 = vpack.c.b16 %v597, %v595
        %v618 = vpack.c.b16 %v600, %v598
        %v619 = vpack.c.b16 %v601, %v599
        %v620 = vpack.c.b16 %v604, %v602
        %v621 = vpack.c.b16 %v605, %v603
        %638 = vmatpush.bf16.msra.mxu0 %v620
        %639 = vmatpush.bf16.msra.mxu0 %v618
        %640 = vmatpush.bf16.msra.mxu0 %v616
        %641 = vmatpush.bf16.msra.mxu0 %v614
        %642 = vmatpush.bf16.msra.mxu0 %v612
        %643 = vmatpush.bf16.msra.mxu0 %v610
        %644 = vmatpush.bf16.msra.mxu0 %v608
        %645 = vmatpush.bf16.msra.mxu0 %v606
        %646 = vmatmul.bf16.gmra.mxu0 %v455
        %v647 = vpop.f32.mrf.mxu0
        %v648 = vadd.f32 %v554, %v647
        %v649 = vpop.f32.mrf.mxu0
        %650 = vdwg.mxu0
        %651 = vmatpush.bf16.msra.mxu0 %v621
        %652 = vmatpush.bf16.msra.mxu0 %v619
        %653 = vmatpush.bf16.msra.mxu0 %v617
        %654 = vmatpush.bf16.msra.mxu0 %v615
        %655 = vmatpush.bf16.msra.mxu0 %v613
        %656 = vmatpush.bf16.msra.mxu0 %v611
        %657 = vmatpush.bf16.msra.mxu0 %v609
        %658 = vmatpush.bf16.msra.mxu0 %v607
        %659 = vmatmul.bf16.gmra.mxu0 %v455
        %v660 = vpop.f32.mrf.mxu0
        %v661 = vadd.f32 %v555, %v660
        %v662 = vpop.f32.mrf.mxu0
        %663 = vdwg.mxu0
        %v664 = vperm.slane %v533, 0
        %v665 = vmul.f32 %v664, %v648
        %v666 = vpack.c.bf16 %v665, %v665
        %v667 = vld [vmem:[%s8] sm:$0xf]
        %v668 = vld [vmem:[%s8 + $0x4] sm:$0xf]
        %v669 = vld [vmem:[%s8 + $0x8] sm:$0xf]
        %v670 = vld [vmem:[%s8 + $0xc] sm:$0xf]
        %v671 = vld [vmem:[%s8 + $0x10] sm:$0xf]
        %v672 = vld [vmem:[%s8 + $0x14] sm:$0xf]
        %v673 = vld [vmem:[%s8 + $0x18] sm:$0xf]
        %v674 = vld [vmem:[%s8 + $0x1c] sm:$0xf]
        %v675 = vld [vmem:[%s8 + $0x20] sm:$0xf]
        %v676 = vld [vmem:[%s8 + $0x24] sm:$0xf]
        %v677 = vld [vmem:[%s8 + $0x28] sm:$0xf]
        %v678 = vld [vmem:[%s8 + $0x2c] sm:$0xf]
        %v679 = vld [vmem:[%s8 + $0x30] sm:$0xf]
        %v680 = vld [vmem:[%s8 + $0x34] sm:$0xf]
        %v681 = vld [vmem:[%s8 + $0x38] sm:$0xf]
        %v682 = vld [vmem:[%s8 + $0x3c] sm:$0xf]
        %v699 = vunpack.c.l.b16 %v667
        %v700 = vunpack.c.l.b16 %v668
        %v701 = vunpack.c.l.b16 %v669
        %v702 = vunpack.c.l.b16 %v670
        %v703 = vunpack.c.l.b16 %v671
        %v704 = vunpack.c.l.b16 %v672
        %v705 = vunpack.c.l.b16 %v673
        %v706 = vunpack.c.l.b16 %v674
        %v707 = vunpack.c.l.b16 %v675
        %v708 = vunpack.c.l.b16 %v676
        %v709 = vunpack.c.l.b16 %v677
        %v710 = vunpack.c.l.b16 %v678
        %v711 = vunpack.c.l.b16 %v679
        %v712 = vunpack.c.l.b16 %v680
        %v713 = vunpack.c.l.b16 %v681
        %v714 = vunpack.c.l.b16 %v682
        %v715 = vpack.c.b16 %v700, %v699
        %v716 = vpack.c.b16 %v702, %v701
        %v717 = vpack.c.b16 %v704, %v703
        %v718 = vpack.c.b16 %v706, %v705
        %v719 = vpack.c.b16 %v708, %v707
        %v720 = vpack.c.b16 %v710, %v709
        %v721 = vpack.c.b16 %v712, %v711
        %v722 = vpack.c.b16 %v714, %v713
        %731 = vmatpush.bf16.msra.mxu0 %v722
        %732 = vmatpush.bf16.msra.mxu0 %v721
        %733 = vmatpush.bf16.msra.mxu0 %v720
        %734 = vmatpush.bf16.msra.mxu0 %v719
        %735 = vmatpush.bf16.msra.mxu0 %v718
        %736 = vmatpush.bf16.msra.mxu0 %v717
        %737 = vmatpush.bf16.msra.mxu0 %v716
        %738 = vmatpush.bf16.msra.mxu0 %v715
        %739 = vmatmul.bf16.gmra.mxu0 %v666
        %v740 = vpop.f32.mrf.mxu0
        %v741 = vadd.f32 0.0, %v740
        %v742 = vpop.f32.mrf.mxu0
        %743 = vdwg.mxu0
        %vm744 = vcmask 31744
        %v745 = vsel %vm744, %v741, -inf
        %v746 = vrot.slane %v745, 4
        %v747 = vmax.f32 %v745, %v746
        %v748 = vrot.slane %v747, 2
        %v749 = vmax.f32 %v747, %v748
        %v750 = vrot.slane %v749, 1
        %v751 = vmax.f32 %v749, %v750
        %v752 = vsub.f32 %v741, %v751
        %v753 = vmul.f32 %v752, 1.442695
        %v754 = vpow.pop %v753
        %v755 = vpack.c.bf16 %v754, %v754
        %v756 = vld [vmem:[%s9] sm:$0x3]
        %v758 = vsel %vm744, %v755, 0
        %vm760 = vcmask 1041408
        %v762 = vsel %vm760, %v756, 0
        %764 = vmatpush.bf16.msra.mxu0 0
        %765 = vmatpush.bf16.msra.mxu0 0
        %766 = vmatpush.bf16.msra.mxu0 0
        %767 = vmatpush.bf16.msra.mxu0 0
        %768 = vmatpush.bf16.msra.mxu0 0
        %769 = vmatpush.bf16.msra.mxu0 0
        %770 = vmatpush.bf16.msra.mxu0 0
        %771 = vmatpush.bf16.msra.mxu0 %v762
        %772 = vmatmul.bf16.gmra.mxu0 %v758
        %v773 = vpop.f32.mrf.mxu0
        %v774 = vadd.f32 0.0, %v773
        %v775 = vpop.f32.mrf.mxu0
        %776 = vdwg.mxu0
        %v777 = vmul.f32 %v774, %v661
        %v778 = vrot.slane %v777, 4
        %v779 = vadd.f32 %v777, %v778
        %v780 = vrot.slane %v779, 2
        %v781 = vadd.f32 %v779, %v780
        %v782 = vrot.slane %v781, 1
        %v783 = vadd.f32 %v781, %v782
        %v784 = vrot.slane %v774, 4
        %v785 = vadd.f32 %v774, %v784
        %v786 = vrot.slane %v785, 2
        %v787 = vadd.f32 %v785, %v786
        %v788 = vrot.slane %v787, 1
        %v789 = vadd.f32 %v787, %v788
        %v790 = vrcp.pop %v789
        %v791 = vmul.f32 %v783, %v790
        %v792 = vld [vmem:[%s7] sm:$0x7]
        %v793 = vpack.c.bf16 %v791, %v791
        %v794 = vld [vmem:[#allocation10] sm:$0xf]
        %v795 = vld [vmem:[#allocation10 + $0x4] sm:$0xf]
        %v796 = vld [vmem:[#allocation10 + $0x8] sm:$0xf]
        %v797 = vld [vmem:[#allocation10 + $0xc] sm:$0xf]
        %v798 = vld [vmem:[#allocation10 + $0x10] sm:$0xf]
        %v799 = vld [vmem:[#allocation10 + $0x14] sm:$0xf]
        %v800 = vld [vmem:[#allocation10 + $0x18] sm:$0xf]
        %v801 = vld [vmem:[#allocation10 + $0x1c] sm:$0xf]
        %v802 = vld [vmem:[#allocation10 + $0x20] sm:$0xf]
        %v803 = vld [vmem:[#allocation10 + $0x24] sm:$0xf]
        %v804 = vld [vmem:[#allocation10 + $0x28] sm:$0xf]
        %v805 = vld [vmem:[#allocation10 + $0x2c] sm:$0xf]
        %v806 = vld [vmem:[#allocation10 + $0x30] sm:$0xf]
        %v807 = vld [vmem:[#allocation10 + $0x34] sm:$0xf]
        %v808 = vld [vmem:[#allocation10 + $0x38] sm:$0xf]
        %v809 = vld [vmem:[#allocation10 + $0x3c] sm:$0xf]
        %v826 = vunpack.c.l.b16 %v794
        %v827 = vunpack.c.l.b16 %v795
        %v828 = vunpack.c.l.b16 %v796
        %v829 = vunpack.c.l.b16 %v797
        %v830 = vunpack.c.l.b16 %v798
        %v831 = vunpack.c.l.b16 %v799
        %v832 = vunpack.c.l.b16 %v800
        %v833 = vunpack.c.l.b16 %v801
        %v834 = vunpack.c.l.b16 %v802
        %v835 = vunpack.c.l.b16 %v803
        %v836 = vunpack.c.l.b16 %v804
        %v837 = vunpack.c.l.b16 %v805
        %v838 = vunpack.c.l.b16 %v806
        %v839 = vunpack.c.l.b16 %v807
        %v840 = vunpack.c.l.b16 %v808
        %v841 = vunpack.c.l.b16 %v809
        %v842 = vpack.c.b16 %v827, %v826
        %v843 = vpack.c.b16 %v829, %v828
        %v844 = vpack.c.b16 %v831, %v830
        %v845 = vpack.c.b16 %v833, %v832
        %v846 = vpack.c.b16 %v835, %v834
        %v847 = vpack.c.b16 %v837, %v836
        %v848 = vpack.c.b16 %v839, %v838
        %v849 = vpack.c.b16 %v841, %v840
        %858 = vmatpush.bf16.msra.mxu0 %v849
        %859 = vmatpush.bf16.msra.mxu0 %v848
        %860 = vmatpush.bf16.msra.mxu0 %v847
        %861 = vmatpush.bf16.msra.mxu0 %v846
        %862 = vmatpush.bf16.msra.mxu0 %v845
        %863 = vmatpush.bf16.msra.mxu0 %v844
        %864 = vmatpush.bf16.msra.mxu0 %v843
        %865 = vmatpush.bf16.msra.mxu0 %v842
        %866 = vmatmul.bf16.gmra.mxu0 %v793
        %v867 = vpop.f32.mrf.mxu0
        %v868 = vadd.f32 %v792, %v867
        %v869 = vpop.f32.mrf.mxu0
        %870 = vdwg.mxu0
        %v871 = vperm.slane %v868, 0
        %v872 = vadd.f32 %v454, %v871
        %873 = vadd.xlane.f32.xlu0 %v872
        %v874 = vpop.xlane.xlu0 %873
        %v875 = vrcp.pop 128.0
        %v876 = vmul.f32 128.0, %v875
        %v877 = vsub.f32 1.0, %v876
        %v878 = vmul.f32 %v875, %v877
        %v879 = vadd.f32 %v875, %v878
        %vm880 = vweird.f32 %v875
        %v881 = vsel %vm880, %v875, %v879
        %v882 = vmul.f32 %v874, %v881
        %v883 = vmul.f32 %v872, %v872
        %884 = vadd.xlane.f32.xlu0 %v883
        %v885 = vpop.xlane.xlu0 %884
        %v886 = vmul.f32 %v885, %v881
        %v887 = vmul.f32 %v882, %v882
        %v888 = vsub.f32 %v886, %v887
        %v889 = vsub.f32 %v872, %v882
        %v890 = vadd.f32 %v888, 1e-05
        %v891 = vrsqrt.pop %v890
        %v892 = vmul.f32 %v891, %v890
        %v893 = vmul.f32 %v892, %v891
        %v894 = vmul.f32 0.5, %v893
        %v895 = vsub.f32 1.5, %v894
        %v896 = vmul.f32 %v891, %v895
        %vm897 = vweird.f32 %v890
        %vm898 = vweird.f32 %v891
        %vm899 = vmor %vm897, %vm898
        %v900 = vsel %vm899, %v891, %v896
        %v901 = vmul.f32 %v889, %v900
        %v902 = vperm.slane %v792, 1
        %v903 = vmul.f32 %v901, %v902
        %v904 = vperm.slane %v792, 2
        %v905 = vadd.f32 %v903, %v904
        %906 = vst [vmem:[%s449] sm:$0xff] %v905
        %s907 = sand.u32 %s257, 1
        %s908 = scalar_lea.sflag [#allocation4], %s907
        %s909 = sand.u32 %s257, 1
        %s910 = smul.addr %s909, 8
        %s911 = scalar_lea.vmem [#allocation11], %s910
        // Predicated region
        $region81: #{tpu_custom_call.1} parent=59 // pred_check
          %p912 = pneg %p267
        $region82: #{tpu_custom_call.1} parent=59 // pred_check_branch
          %914 = sbr.rel (%p912) target = $region84
        $region83: #{tpu_custom_call.1} parent=59 // pred_region
          %916 = vsyncadd %s908, 0
          %s917 = smul.addr %s29, 8
          %s918 = scalar_lea.hbm %s10, %s917
          %s920 = sshll.u32 %s911, 4
          %s921 = int_to_ptr.vmem [resolvable:$true] %s920
          %s922 = sshll.u32 %s918, 4
          %s923 = int_to_ptr.hbm [resolvable:$true] %s922
          %925 = dma.vmem_to_hbm [thread:$0]  %s921, 128, %s923, %s908
        $region84: #{tpu_custom_call.1} parent=59 // pred_fallthru
          _
      $region60: #{tpu_custom_call.1} parent=5 // pred_fallthru
        _
      %p926 = scmp.le.s32.totalorder 2, %s24
      // Predicated region
      $region85: #{tpu_custom_call.1} parent=5 // pred_check
        %p927 = pneg %p926
      $region86: #{tpu_custom_call.1} parent=5 // pred_check_branch
        %929 = sbr.rel (%p927) target = $region88
      $region87: #{tpu_custom_call.1} parent=5 // pred_region
        %s930 = ssub.s32 %s24, 2
        // Predicated region
        $region89: #{tpu_custom_call.1} parent=87 // pred_check
          %p931 = pneg %p273
        $region90: #{tpu_custom_call.1} parent=87 // pred_check_branch
          %933 = sbr.rel (%p931) target = $region92
        $region91: #{tpu_custom_call.1} parent=87 // pred_region
          %s934 = sand.u32 %s258, 1
          %s935 = scalar_lea.sflag [#allocation4], %s934
          %s936 = sand.u32 %s258, 1
          %s937 = smul.addr %s936, 8
          %s938 = scalar_lea.vmem [#allocation11], %s937
          %940 = dma.done %s935, 128
        $region92: #{tpu_custom_call.1} parent=87 // pred_fallthru
          _
      $region88: #{tpu_custom_call.1} parent=5 // pred_fallthru
        _
    $region6: #{tpu_custom_call.1} parent=1 // loop_footer
      %s28 = sadd.s32 1, %s24
    $region7: #{tpu_custom_call.1} parent=1 // loop_footer_branch
      %23 = sbr.rel target = $region3
    $region8: #{tpu_custom_call.1} parent=1 // loop_exit
      _
    %941 = vsyncpa [#allocation3], 1
    %s942 = scalar_lea.sflag [#allocation3], 1
    %943 = vsyncpa %s942, 1
    %944 = vsyncpa [#allocation6], 1
    %945 = vsyncpa [#allocation9], 1
    %946 = vsyncpa [#allocation4], 1
    %s947 = scalar_lea.sflag [#allocation4], 1
    %948 = vsyncpa %s947, 1

</llo_original>
